<compile_context>
chip_gen: v6e
topology: v6e:2x2x1
jax: 0.10.0
libtpu: 0.0.40
codegen_flags: <defaults>
</compile_context>

<pallas_src>
import numpy as np
import jax
import jax.numpy as jnp
from jax import lax
from jax.experimental import pallas as pl
from jax.experimental.pallas import tpu as pltpu


def _round_up(n, m):
    return ((n + m - 1) // m) * m


def _sel_matrix(n_rows, n_cols, stride, kernel_size, row_offset):
    """0/1 window-selection matrix generated in-kernel (no HBM stream).

    entry (t, n) == 1 iff band-local input column (row_offset + t) lies inside
    the pooling window of local output n:
        n*stride <= row_offset + t < n*stride + kernel_size
    """
    t = lax.broadcasted_iota(jnp.int32, (n_rows, n_cols), 0) + row_offset
    n = lax.broadcasted_iota(jnp.int32, (n_rows, n_cols), 1)
    lo = n * stride
    return ((t >= lo) & (t < lo + kernel_size)).astype(jnp.float32)


def _make_kernel(*, has_mask, two_blocks, TM, TN, STEP, E_pad, stride, kernel_size):
    def stacked_lhs(x, valid):
        # Fuse sum & count into one matmul: stack [masked_x ; mask] on sublanes.
        xm = jnp.where(valid, x, jnp.zeros_like(x))
        mf = valid.astype(jnp.float32)
        return jnp.concatenate([xm, mf], axis=0)          # (2*TM, width)

    def kernel(*refs):
        if has_mask and two_blocks:
            x0_ref, m0_ref, x1_ref, m1_ref, o_ref = refs
        elif has_mask:
            x0_ref, m0_ref, o_ref = refs
        elif two_blocks:
            x0_ref, x1_ref, o_ref = refs
        else:
            x0_ref, o_ref = refs

        x0 = x0_ref[...].astype(jnp.float32)
        v0 = (m0_ref[...] != 0) if has_mask else ~jnp.isnan(x0)
        acc = jnp.dot(stacked_lhs(x0, v0),
                      _sel_matrix(STEP, TN, stride, kernel_size, 0),
                      preferred_element_type=jnp.float32)   # (2*TM, TN)

        if two_blocks:
            # Overhang into the next STEP block (kernel_size > stride).
            x1 = x1_ref[:, :E_pad].astype(jnp.float32)
            v1 = (m1_ref[:, :E_pad] != 0) if has_mask else ~jnp.isnan(x1)
            acc = acc + jnp.dot(stacked_lhs(x1, v1),
                                _sel_matrix(E_pad, TN, stride, kernel_size, STEP),
                                preferred_element_type=jnp.float32)

        sum_pooled = acc[:TM]
        valid_count = jnp.maximum(acc[TM:], 1.0)             # clamp(min=1)
        avg = sum_pooled / valid_count
        # Faithful to the PyTorch module: exactly-zero averages become NaN.
        o_ref[...] = jnp.where(avg == 0.0, jnp.float32(jnp.nan), avg)

    return kernel


def masked_avg_pool1d(x, mask=None, *, kernel_size, stride=None, padding=0):
    """Masked average pooling, layout (B, W) or (B, C, W) like the nn.Module."""
    S = int(stride or kernel_size)
    K = int(kernel_size)
    P = int(padding)

    x = jnp.asarray(x)
    ndim = x.ndim
    if ndim == 2:
        x = x[:, None, :]
        if mask is not None and jnp.asarray(mask).ndim == 2:
            mask = jnp.asarray(mask)[:, None, :]
    assert x.ndim == 3, "Input must be (B, W) or (B, C, W)"
    if mask is not None:
        mask = jnp.asarray(mask)
        assert mask.shape == x.shape, "Input tensor and mask must have the same shape"

    if not jnp.issubdtype(x.dtype, jnp.floating):
        x = x.astype(jnp.float32)

    B, C, W = x.shape
    Wo = (W + 2 * P - K) // S + 1
    assert Wo >= 1, "Output width must be positive"

    R = B * C
    itemsize = jnp.dtype(x.dtype).itemsize
    # Sublane multiple for the x dtype (f32: 8, bf16: 16); int8 mask needs 32.
    sub = max(8, 32 // itemsize)
    if mask is not None:
        sub = max(sub, 32)

    # Output tile: lane-dense; 256-aligned for the 256-wide v6e/v7x MXU when Wo
    # is large; shrink for very large strides so the input band stays bounded.
    TN = 256 if Wo > 128 else 128
    while TN > 128 and TN * S > 4096:
        TN //= 2
    STEP = TN * S                 # input band advanced per output tile

    # Row tile: up to 128 rows -> 256-row stacked LHS matching the MXU height.
    TM = min(128, _round_up(R, sub))
    while TM > sub and 2 * TM * STEP * itemsize > (8 << 20):
        TM = max(sub, ((TM // 2) // sub) * sub)
    R_pad = _round_up(R, TM)

    Wo_pad = _round_up(Wo, TN)
    nj = Wo_pad // TN

    # Band overhang into the next STEP block (only when kernel_size > stride).
    E = max(K - S, 0)
    E_pad = _round_up(E, 128) if E > 0 else 0
    assert E_pad <= STEP, "kernel_size too large relative to stride * output tile"
    two_blocks = E_pad > 0
    if two_blocks and STEP % E_pad == 0:
        E_blk = E_pad
        _q = STEP // E_pad
        x1_map = lambda i, j: (i, (j + 1) * _q)     # E_pad-sized blocks
    elif two_blocks:
        E_blk = STEP
        x1_map = lambda i, j: (i, j + 1)            # fall back: next full block
    else:
        E_blk = 0
        x1_map = None

    # Padded input covering every block read.  Padding is NaN on the isnan path
    # (mask=0 on the explicit-mask path) so it contributes to neither sum nor
    # count, exactly like conv1d's implicit zero padding in the reference.
    need = nj * STEP + E_blk
    Wp = max(need, P + W)
    pad_val = float("nan") if mask is None else 0.0
    xp = jnp.pad(x.reshape(R, W), ((0, R_pad - R), (P, Wp - P - W)),
                 constant_values=pad_val)

    operands = [xp]
    in_specs = [pl.BlockSpec((TM, STEP), lambda i, j: (i, j))]
    if mask is not None:
        mp = jnp.pad(mask.reshape(R, W).astype(jnp.int8),
                     ((0, R_pad - R), (P, Wp - P - W)))
        operands.append(mp)
        in_specs.append(pl.BlockSpec((TM, STEP), lambda i, j: (i, j)))
    if two_blocks:
        operands.append(xp)
        in_specs.append(pl.BlockSpec((TM, E_blk), x1_map))
        if mask is not None:
            operands.append(mp)
            in_specs.append(pl.BlockSpec((TM, E_blk), x1_map))

    out_spec = pl.BlockSpec((TM, TN), lambda i, j: (i, j))
    grid = (R_pad // TM, nj)

    kernel = _make_kernel(has_mask=mask is not None, two_blocks=two_blocks,
                          TM=TM, TN=TN, STEP=STEP, E_pad=E_pad,
                          stride=S, kernel_size=K)

    # VMEM budget: double-buffered tiles + in-kernel temporaries (stacked LHS,
    # widened x, iota-generated selection matrices, accumulators).
    vmem_est = (
        2 * TM * STEP * itemsize
        + (2 * TM * E_blk * itemsize if two_blocks else 0)
        + (2 * TM * STEP if mask is not None else 0)
        + (2 * TM * E_blk if (mask is not None and two_blocks) else 0)
        + 2 * TM * TN * 4
        + 3 * TM * STEP * 4 + STEP * TN * 4
        + (3 * TM * E_pad * 4 + E_pad * TN * 4 if two_blocks else 0)
        + 6 * TM * TN * 4
        + (4 << 20)
    )
    params = pltpu.CompilerParams(
        dimension_semantics=("parallel", "parallel"),
        vmem_limit_bytes=int(min(max(vmem_est, 16 << 20), 48 << 20)),
    )

    out2 = pl.pallas_call(
        kernel,
        out_shape=jax.ShapeDtypeStruct((R_pad, Wo_pad), jnp.float32),
        grid_spec=pl.GridSpec(grid=grid, in_specs=in_specs, out_specs=out_spec),
        compiler_params=params,
    )(*operands)

    out = out2[:R, :Wo].reshape(B, C, Wo)
    if ndim == 2:
        out = out[:, 0, :]
    return out


def _reference_numpy(x, mask, kernel_size, stride, padding):
    # Pure-numpy replica of the PyTorch forward (for correctness check).
    x = np.asarray(x, dtype=np.float32)
    if mask is None:
        mask = ~np.isnan(x)
    mask = np.asarray(mask, dtype=bool)
    B, C, W = x.shape
    xm = np.where(mask, x, 0.0)
    xp = np.pad(xm, ((0, 0), (0, 0), (padding, padding)))
    mp = np.pad(mask.astype(np.float32), ((0, 0), (0, 0), (padding, padding)))
    Wp = W + 2 * padding
    Wo = (Wp - kernel_size) // stride + 1
    out = np.zeros((B, C, Wo), dtype=np.float32)
    for o in range(Wo):
        s = o * stride
        window_sum = xp[:, :, s:s + kernel_size].sum(-1)
        window_cnt = np.maximum(mp[:, :, s:s + kernel_size].sum(-1), 1.0)
        out[:, :, o] = window_sum / window_cnt
    out[out == 0.0] = np.nan
    return out


if __name__ == "__main__":
    B, C, W = 2, 4, 16
    kernel_size, stride, padding = 4, 2, 1

    key = jax.random.PRNGKey(0)
    kx, kn, km = jax.random.split(key, 3)
    x = jax.random.normal(kx, (B, C, W), dtype=jnp.float32)

    # Path 1: implicit mask from NaNs (the penn.py usage), kernel > stride.
    nan_mask = jax.random.bernoulli(kn, p=0.25, shape=(B, C, W))
    x_nan = jnp.where(nan_mask, jnp.float32(jnp.nan), x)
    out1 = masked_avg_pool1d(x_nan, kernel_size=kernel_size, stride=stride, padding=padding)
    out1 = jax.block_until_ready(out1)
    ref1 = _reference_numpy(np.asarray(x_nan), None, kernel_size, stride, padding)
    np.testing.assert_allclose(np.asarray(out1), ref1, rtol=1e-5, atol=1e-6)

    # Path 2: explicit boolean mask (streamed as int8, widened in-kernel).
    mask = jax.random.bernoulli(km, p=0.7, shape=(B, C, W))
    out2 = masked_avg_pool1d(x, mask, kernel_size=kernel_size, stride=stride, padding=padding)
    out2 = jax.block_until_ready(out2)
    ref2 = _reference_numpy(np.asarray(x), np.asarray(mask), kernel_size, stride, padding)
    np.testing.assert_allclose(np.asarray(out2), ref2, rtol=1e-5, atol=1e-6)

    # Path 3: module default stride (= kernel_size) -> single-band fast path.
    out3 = masked_avg_pool1d(x_nan, kernel_size=4, stride=None, padding=0)
    out3 = jax.block_until_ready(out3)
    ref3 = _reference_numpy(np.asarray(x_nan), None, 4, 4, 0)
    np.testing.assert_allclose(np.asarray(out3), ref3, rtol=1e-5, atol=1e-6)

    print("KERNEL_OK")
</pallas_src>

<mosaic_0001>
module attributes {stable_mosaic.version = 11 : i64} {
  func.func @kernel(%arg0: i32, %arg1: i32, %arg2: memref<8x256xf32, #tpu.memory_space<vmem>>, %arg3: memref<8x128xf32, #tpu.memory_space<vmem>>, %arg4: memref<8x128xf32, #tpu.memory_space<vmem>>) attributes {dimension_semantics = [#tpu.dimension_semantics<parallel>, #tpu.dimension_semantics<parallel>], iteration_bounds = array<i64: 1, 1>, scalar_prefetch = 0 : i64, scratch_operands = 0 : i64, tpu.core_type = #tpu.core_type<tc>, window_params = [{transform_indices = @transform_0, window_bounds = array<i64: 8, 256>}, {transform_indices = @transform_1, window_bounds = array<i64: 8, 128>}, {transform_indices = @transform_2, window_bounds = array<i64: 8, 128>}]} {
    %c0 = arith.constant 0 : index
    %c0_0 = arith.constant 0 : index
    %0 = vector.load %arg2[%c0, %c0_0] : memref<8x256xf32, #tpu.memory_space<vmem>>, vector<8x256xf32>
    %1 = arith.cmpf one, %0, %0 : vector<8x256xf32>
    %cst = arith.constant dense<true> : vector<8x256xi1>
    %2 = arith.xori %1, %cst : vector<8x256xi1>
    %cst_1 = arith.constant 0.000000e+00 : f32
    %3 = vector.broadcast %cst_1 : f32 to vector<8x256xf32>
    %4 = arith.select %2, %0, %3 : vector<8x256xi1>, vector<8x256xf32>
    %5 = arith.extui %2 : vector<8x256xi1> to vector<8x256xi32>
    %6 = arith.sitofp %5 : vector<8x256xi32> to vector<8x256xf32>
    %7 = tpu.concatenate %4, %6 in 0 : vector<8x256xf32>, vector<8x256xf32> -> vector<16x256xf32>
    %8 = tpu.iota {dimensions = array<i32: 0>} : vector<256x128xi32>
    %c0_i32 = arith.constant 0 : i32
    %9 = vector.broadcast %c0_i32 : i32 to vector<256x128xi32>
    %10 = arith.addi %8, %9 : vector<256x128xi32>
    %11 = tpu.iota {dimensions = array<i32: 1>} : vector<256x128xi32>
    %c2_i32 = arith.constant 2 : i32
    %12 = vector.broadcast %c2_i32 : i32 to vector<256x128xi32>
    %13 = arith.muli %11, %12 : vector<256x128xi32>
    %14 = arith.cmpi sge, %10, %13 : vector<256x128xi32>
    %c4_i32 = arith.constant 4 : i32
    %15 = vector.broadcast %c4_i32 : i32 to vector<256x128xi32>
    %16 = arith.addi %13, %15 : vector<256x128xi32>
    %17 = arith.cmpi slt, %10, %16 : vector<256x128xi32>
    %18 = arith.andi %14, %17 : vector<256x128xi1>
    %19 = arith.extui %18 : vector<256x128xi1> to vector<256x128xi32>
    %20 = arith.sitofp %19 : vector<256x128xi32> to vector<256x128xf32>
    %cst_2 = arith.constant dense<0.000000e+00> : vector<16x128xf32>
    %21 = tpu.matmul %7, %20, %cst_2 {dimension_numbers = #tpu.dot_dimension_numbers<[1], [0], [0], [1], [0, 0, 1, 1], [], []>} : vector<16x256xf32>, vector<256x128xf32>, vector<16x128xf32> -> vector<16x128xf32>
    %c0_3 = arith.constant 0 : index
    %c0_4 = arith.constant 0 : index
    %22 = vector.load %arg3[%c0_3, %c0_4] : memref<8x128xf32, #tpu.memory_space<vmem>>, vector<8x128xf32>
    %23 = arith.cmpf one, %22, %22 : vector<8x128xf32>
    %cst_5 = arith.constant dense<true> : vector<8x128xi1>
    %24 = arith.xori %23, %cst_5 : vector<8x128xi1>
    %cst_6 = arith.constant 0.000000e+00 : f32
    %25 = vector.broadcast %cst_6 : f32 to vector<8x128xf32>
    %26 = arith.select %24, %22, %25 : vector<8x128xi1>, vector<8x128xf32>
    %27 = arith.extui %24 : vector<8x128xi1> to vector<8x128xi32>
    %28 = arith.sitofp %27 : vector<8x128xi32> to vector<8x128xf32>
    %29 = tpu.concatenate %26, %28 in 0 : vector<8x128xf32>, vector<8x128xf32> -> vector<16x128xf32>
    %30 = tpu.iota {dimensions = array<i32: 0>} : vector<128x128xi32>
    %c256_i32 = arith.constant 256 : i32
    %31 = vector.broadcast %c256_i32 : i32 to vector<128x128xi32>
    %32 = arith.addi %30, %31 : vector<128x128xi32>
    %33 = tpu.iota {dimensions = array<i32: 1>} : vector<128x128xi32>
    %c2_i32_7 = arith.constant 2 : i32
    %34 = vector.broadcast %c2_i32_7 : i32 to vector<128x128xi32>
    %35 = arith.muli %33, %34 : vector<128x128xi32>
    %36 = arith.cmpi sge, %32, %35 : vector<128x128xi32>
    %c4_i32_8 = arith.constant 4 : i32
    %37 = vector.broadcast %c4_i32_8 : i32 to vector<128x128xi32>
    %38 = arith.addi %35, %37 : vector<128x128xi32>
    %39 = arith.cmpi slt, %32, %38 : vector<128x128xi32>
    %40 = arith.andi %36, %39 : vector<128x128xi1>
    %41 = arith.extui %40 : vector<128x128xi1> to vector<128x128xi32>
    %42 = arith.sitofp %41 : vector<128x128xi32> to vector<128x128xf32>
    %cst_9 = arith.constant dense<0.000000e+00> : vector<16x128xf32>
    %43 = tpu.matmul %29, %42, %cst_9 {dimension_numbers = #tpu.dot_dimension_numbers<[1], [0], [0], [1], [0, 0, 1, 1], [], []>} : vector<16x128xf32>, vector<128x128xf32>, vector<16x128xf32> -> vector<16x128xf32>
    %44 = arith.addf %21, %43 : vector<16x128xf32>
    %45 = vector.extract_strided_slice %44 {offsets = [0, 0], sizes = [8, 128], strides = [1, 1]} : vector<16x128xf32> to vector<8x128xf32>
    %46 = vector.extract_strided_slice %44 {offsets = [8, 0], sizes = [8, 128], strides = [1, 1]} : vector<16x128xf32> to vector<8x128xf32>
    %cst_10 = arith.constant 1.000000e+00 : f32
    %47 = vector.broadcast %cst_10 : f32 to vector<8x128xf32>
    %48 = arith.maximumf %46, %47 : vector<8x128xf32>
    %49 = arith.divf %45, %48 : vector<8x128xf32>
    %cst_11 = arith.constant 0.000000e+00 : f32
    %50 = vector.broadcast %cst_11 : f32 to vector<8x128xf32>
    %51 = arith.cmpf oeq, %49, %50 : vector<8x128xf32>
    %cst_12 = arith.constant 0x7FC00000 : f32
    %52 = vector.broadcast %cst_12 : f32 to vector<8x128xf32>
    %53 = arith.select %51, %52, %49 : vector<8x128xi1>, vector<8x128xf32>
    %c0_13 = arith.constant 0 : index
    %c0_14 = arith.constant 0 : index
    %54 = vector.load %arg4[%c0_13, %c0_14] : memref<8x128xf32, #tpu.memory_space<vmem>>, vector<8x128xf32>
    tpu.vector_store %arg4[%c0_13, %c0_14], %53 {strides = array<i32>} : memref<8x128xf32, #tpu.memory_space<vmem>>, vector<8x128xf32>,
    return
  }
  func.func @transform_0(%arg0: i32, %arg1: i32) -> (i32, i32) {
    %c0_i32 = arith.constant 0 : i32
    return %arg0, %arg1 : i32, i32
  }
  func.func @transform_1(%arg0: i32, %arg1: i32) -> (i32, i32) {
    %c1_i32 = arith.constant 1 : i32
    %0 = arith.addi %arg1, %c1_i32 : i32
    %c2_i32 = arith.constant 2 : i32
    %1 = arith.muli %0, %c2_i32 : i32
    %c0_i32 = arith.constant 0 : i32
    return %arg0, %1 : i32, i32
  }
  func.func @transform_2(%arg0: i32, %arg1: i32) -> (i32, i32) {
    %c0_i32 = arith.constant 0 : i32
    return %arg0, %arg1 : i32, i32
  }
}

</mosaic_0001>

<llo_original>
// kernel: tpu_custom_call.1
$region0: #{tpu_custom_call.1}
  #allocation0 [shape = 'u32[]', space=smem, size = 0x4, offset = 0x4, fixed_abs, tag = 'smem constant byte address 0x4 - core index']
  #allocation1 [shape = 'u32[144,128]{1,0:T(1,128)}', space=vmem, size = 0x12000, scoped, tag = 'internal scratch']
  %s0 = inlined_call_operand.hbm [shape: f32[8,384], index: 0, kind: input, shape index: {}]
  %s1 = inlined_call_operand.hbm [shape: f32[8,384], index: 1, kind: input, shape index: {}]
  %s2 = inlined_call_operand.hbm [shape: f32[8,128], index: 2, kind: output, shape index: {}]
  %s3 = sld [smem:[#allocation0]]
  $region26: #{tpu_custom_call.1} parent=0
    _
  %s5 = ssub.s32 1, %s3
  %s6 = scalar_select 0, %s5, %s3
  $region1: #{tpu_custom_call.1} parent=0
    #allocation2 [shape = 'u8[8192]{0}', space=vmem, size = 0x2000, scoped, tag = 'input window, operand 0, single buffered']
    #allocation3 [shape = 's32[1]{0}', space=sflag, size = 0x4, scoped, tag = 'scoped memory for tpu_custom_call.1']
    #allocation4 [shape = 's32[1]{0}', space=sflag, size = 0x4, scoped, tag = 'scoped memory for tpu_custom_call.1']
    #allocation5 [shape = 'u8[4096]{0}', space=vmem, size = 0x1000, scoped, tag = 'input window, operand 1, single buffered']
    #allocation6 [shape = 's32[1]{0}', space=sflag, size = 0x4, scoped, tag = 'scoped memory for tpu_custom_call.1']
    #allocation7 [shape = 'u8[4096]{0}', space=vmem, size = 0x1000, scoped, tag = 'output window, operand 0, single buffered']
    %7 = vsyncpa [#allocation3], 0
    %8 = vsyncpa [#allocation6], 0
    %9 = vsyncpa [#allocation4], 0
    // Predicated region
    $region2: #{tpu_custom_call.1} parent=1 // pred_check
      _
    $region3: #{tpu_custom_call.1} parent=1 // pred_check_branch
      %11 = sbr.rel (0) target = $region5
    $region4: #{tpu_custom_call.1} parent=1 // pred_region
      %s13 = ssub.s32 256, 256
      %14 = vsyncadd [#allocation3], %s13
      %s16 = sshll.u32 [#allocation2], 4
      %s17 = int_to_ptr.vmem [resolvable:$true] %s16
      %19 = dma.hbm_to_vmem [thread:$0]  %s0, 256, %s17, [#allocation3]
    $region5: #{tpu_custom_call.1} parent=1 // pred_fallthru
      _
    // Predicated region
    $region6: #{tpu_custom_call.1} parent=1 // pred_check
      _
    $region7: #{tpu_custom_call.1} parent=1 // pred_check_branch
      %21 = sbr.rel (0) target = $region9
    $region8: #{tpu_custom_call.1} parent=1 // pred_region
      %s22 = sadd.s32 0, 1
      %s23 = smul.u32 %s22, 2
      %s25 = ssub.s32 128, 128
      %26 = vsyncadd [#allocation6], %s25
      %s27 = smul.addr %s23, 128
      %s28 = scalar_lea.hbm %s1, %s27
      %s30 = sshll.u32 [#allocation5], 4
      %s31 = int_to_ptr.vmem [resolvable:$true] %s30
      %33 = dma.hbm_to_vmem [thread:$0]  %s28, 128, %s31, [#allocation6]
    $region9: #{tpu_custom_call.1} parent=1 // pred_fallthru
      _
    // Predicated region
    $region10: #{tpu_custom_call.1} parent=1 // pred_check
      _
    $region11: #{tpu_custom_call.1} parent=1 // pred_check_branch
      %35 = sbr.rel (0) target = $region13
    $region12: #{tpu_custom_call.1} parent=1 // pred_region
      %36 = dma.done [#allocation3], 256
    $region13: #{tpu_custom_call.1} parent=1 // pred_fallthru
      _
    // Predicated region
    $region14: #{tpu_custom_call.1} parent=1 // pred_check
      _
    $region15: #{tpu_custom_call.1} parent=1 // pred_check_branch
      %38 = sbr.rel (0) target = $region17
    $region16: #{tpu_custom_call.1} parent=1 // pred_region
      %39 = dma.done [#allocation6], 128
    $region17: #{tpu_custom_call.1} parent=1 // pred_fallthru
      _
    %s40 = sadd.s32 0, 1
    %s41 = smul.u32 %s40, 2
    %v42 = vld [vmem:[#allocation2] sm:$0xff]
    %v43 = vld [vmem:[#allocation2 + $0x8] sm:$0xff]
    %vm44 = vcmp.ne.f32.partialorder %v42, %v42
    %vm45 = vcmp.ne.f32.partialorder %v43, %v43
    %vm46 = vmxor %vm44, 1
    %vm47 = vmxor %vm45, 1
    %v48 = vsel %vm46, %v42, 0.0
    %v49 = vsel %vm47, %v43, 0.0
    %v50 = vsel %vm46, 1, 0
    %v51 = vsel %vm47, 1, 0
    %v52 = vcvt.s32.f32 %v50
    %v53 = vcvt.s32.f32 %v51
    %v54 = vlaneseq
    %v55 = vshrl.u32 %v54, 7
    %v56 = vadd.s32 %v55, 8
    %v57 = vadd.s32 %v55, 16
    %v58 = vadd.s32 %v55, 24
    %v59 = vadd.s32 %v55, 32
    %v60 = vadd.s32 %v55, 40
    %v61 = vadd.s32 %v55, 48
    %v62 = vadd.s32 %v55, 56
    %v63 = vadd.s32 %v55, 64
    %v64 = vadd.s32 %v55, 72
    %v65 = vadd.s32 %v55, 80
    %v66 = vadd.s32 %v55, 88
    %v67 = vadd.s32 %v55, 96
    %v68 = vadd.s32 %v55, 104
    %v69 = vadd.s32 %v55, 112
    %v70 = vadd.s32 %v55, 120
    %v71 = vadd.s32 %v55, 128
    %v72 = vadd.s32 %v55, 136
    %v73 = vadd.s32 %v55, 144
    %v74 = vadd.s32 %v55, 152
    %v75 = vadd.s32 %v55, 160
    %v76 = vadd.s32 %v55, 168
    %v77 = vadd.s32 %v55, 176
    %v78 = vadd.s32 %v55, 184
    %v79 = vadd.s32 %v55, 192
    %v80 = vadd.s32 %v55, 200
    %v81 = vadd.s32 %v55, 208
    %v82 = vadd.s32 %v55, 216
    %v83 = vadd.s32 %v55, 224
    %v84 = vadd.s32 %v55, 232
    %v85 = vadd.s32 %v55, 240
    %v86 = vadd.s32 %v55, 248
    %v87 = vlaneseq
    %v88 = vand.u32 %v87, 127
    %v89 = vmul.u32 %v88, 2
    %vm90 = vcmp.ge.s32.totalorder %v55, %v89
    %vm91 = vcmp.ge.s32.totalorder %v56, %v89
    %vm92 = vcmp.ge.s32.totalorder %v57, %v89
    %vm93 = vcmp.ge.s32.totalorder %v58, %v89
    %vm94 = vcmp.ge.s32.totalorder %v59, %v89
    %vm95 = vcmp.ge.s32.totalorder %v60, %v89
    %vm96 = vcmp.ge.s32.totalorder %v61, %v89
    %vm97 = vcmp.ge.s32.totalorder %v62, %v89
    %vm98 = vcmp.ge.s32.totalorder %v63, %v89
    %vm99 = vcmp.ge.s32.totalorder %v64, %v89
    %vm100 = vcmp.ge.s32.totalorder %v65, %v89
    %vm101 = vcmp.ge.s32.totalorder %v66, %v89
    %vm102 = vcmp.ge.s32.totalorder %v67, %v89
    %vm103 = vcmp.ge.s32.totalorder %v68, %v89
    %vm104 = vcmp.ge.s32.totalorder %v69, %v89
    %vm105 = vcmp.ge.s32.totalorder %v70, %v89
    %vm106 = vcmp.ge.s32.totalorder %v71, %v89
    %vm107 = vcmp.ge.s32.totalorder %v72, %v89
    %vm108 = vcmp.ge.s32.totalorder %v73, %v89
    %vm109 = vcmp.ge.s32.totalorder %v74, %v89
    %vm110 = vcmp.ge.s32.totalorder %v75, %v89
    %vm111 = vcmp.ge.s32.totalorder %v76, %v89
    %vm112 = vcmp.ge.s32.totalorder %v77, %v89
    %vm113 = vcmp.ge.s32.totalorder %v78, %v89
    %vm114 = vcmp.ge.s32.totalorder %v79, %v89
    %vm115 = vcmp.ge.s32.totalorder %v80, %v89
    %vm116 = vcmp.ge.s32.totalorder %v81, %v89
    %vm117 = vcmp.ge.s32.totalorder %v82, %v89
    %vm118 = vcmp.ge.s32.totalorder %v83, %v89
    %vm119 = vcmp.ge.s32.totalorder %v84, %v89
    %vm120 = vcmp.ge.s32.totalorder %v85, %v89
    %vm121 = vcmp.ge.s32.totalorder %v86, %v89
    %v122 = vadd.s32 %v89, 4
    %vm123 = vcmp.lt.s32.totalorder %v55, %v122
    %vm124 = vcmp.lt.s32.totalorder %v56, %v122
    %vm125 = vcmp.lt.s32.totalorder %v57, %v122
    %vm126 = vcmp.lt.s32.totalorder %v58, %v122
    %vm127 = vcmp.lt.s32.totalorder %v59, %v122
    %vm128 = vcmp.lt.s32.totalorder %v60, %v122
    %vm129 = vcmp.lt.s32.totalorder %v61, %v122
    %vm130 = vcmp.lt.s32.totalorder %v62, %v122
    %vm131 = vcmp.lt.s32.totalorder %v63, %v122
    %vm132 = vcmp.lt.s32.totalorder %v64, %v122
    %vm133 = vcmp.lt.s32.totalorder %v65, %v122
    %vm134 = vcmp.lt.s32.totalorder %v66, %v122
    %vm135 = vcmp.lt.s32.totalorder %v67, %v122
    %vm136 = vcmp.lt.s32.totalorder %v68, %v122
    %vm137 = vcmp.lt.s32.totalorder %v69, %v122
    %vm138 = vcmp.lt.s32.totalorder %v70, %v122
    %vm139 = vcmp.lt.s32.totalorder %v71, %v122
    %vm140 = vcmp.lt.s32.totalorder %v72, %v122
    %vm141 = vcmp.lt.s32.totalorder %v73, %v122
    %vm142 = vcmp.lt.s32.totalorder %v74, %v122
    %vm143 = vcmp.lt.s32.totalorder %v75, %v122
    %vm144 = vcmp.lt.s32.totalorder %v76, %v122
    %vm145 = vcmp.lt.s32.totalorder %v77, %v122
    %vm146 = vcmp.lt.s32.totalorder %v78, %v122
    %vm147 = vcmp.lt.s32.totalorder %v79, %v122
    %vm148 = vcmp.lt.s32.totalorder %v80, %v122
    %vm149 = vcmp.lt.s32.totalorder %v81, %v122
    %vm150 = vcmp.lt.s32.totalorder %v82, %v122
    %vm151 = vcmp.lt.s32.totalorder %v83, %v122
    %vm152 = vcmp.lt.s32.totalorder %v84, %v122
    %vm153 = vcmp.lt.s32.totalorder %v85, %v122
    %vm154 = vcmp.lt.s32.totalorder %v86, %v122
    %vm155 = vmand %vm90, %vm123
    %vm156 = vmand %vm91, %vm124
    %vm157 = vmand %vm92, %vm125
    %vm158 = vmand %vm93, %vm126
    %vm159 = vmand %vm94, %vm127
    %vm160 = vmand %vm95, %vm128
    %vm161 = vmand %vm96, %vm129
    %vm162 = vmand %vm97, %vm130
    %vm163 = vmand %vm98, %vm131
    %vm164 = vmand %vm99, %vm132
    %vm165 = vmand %vm100, %vm133
    %vm166 = vmand %vm101, %vm134
    %vm167 = vmand %vm102, %vm135
    %vm168 = vmand %vm103, %vm136
    %vm169 = vmand %vm104, %vm137
    %vm170 = vmand %vm105, %vm138
    %vm171 = vmand %vm106, %vm139
    %vm172 = vmand %vm107, %vm140
    %vm173 = vmand %vm108, %vm141
    %vm174 = vmand %vm109, %vm142
    %vm175 = vmand %vm110, %vm143
    %vm176 = vmand %vm111, %vm144
    %vm177 = vmand %vm112, %vm145
    %vm178 = vmand %vm113, %vm146
    %vm179 = vmand %vm114, %vm147
    %vm180 = vmand %vm115, %vm148
    %vm181 = vmand %vm116, %vm149
    %vm182 = vmand %vm117, %vm150
    %vm183 = vmand %vm118, %vm151
    %vm184 = vmand %vm119, %vm152
    %vm185 = vmand %vm120, %vm153
    %vm186 = vmand %vm121, %vm154
    %v187 = vsel %vm155, 1, 0
    %v188 = vsel %vm156, 1, 0
    %v189 = vsel %vm157, 1, 0
    %v190 = vsel %vm158, 1, 0
    %v191 = vsel %vm159, 1, 0
    %v192 = vsel %vm160, 1, 0
    %v193 = vsel %vm161, 1, 0
    %v194 = vsel %vm162, 1, 0
    %v195 = vsel %vm163, 1, 0
    %v196 = vsel %vm164, 1, 0
    %v197 = vsel %vm165, 1, 0
    %v198 = vsel %vm166, 1, 0
    %v199 = vsel %vm167, 1, 0
    %v200 = vsel %vm168, 1, 0
    %v201 = vsel %vm169, 1, 0
    %v202 = vsel %vm170, 1, 0
    %v203 = vsel %vm171, 1, 0
    %v204 = vsel %vm172, 1, 0
    %v205 = vsel %vm173, 1, 0
    %v206 = vsel %vm174, 1, 0
    %v207 = vsel %vm175, 1, 0
    %v208 = vsel %vm176, 1, 0
    %v209 = vsel %vm177, 1, 0
    %v210 = vsel %vm178, 1, 0
    %v211 = vsel %vm179, 1, 0
    %v212 = vsel %vm180, 1, 0
    %v213 = vsel %vm181, 1, 0
    %v214 = vsel %vm182, 1, 0
    %v215 = vsel %vm183, 1, 0
    %v216 = vsel %vm184, 1, 0
    %v217 = vsel %vm185, 1, 0
    %v218 = vsel %vm186, 1, 0
    %v219 = vcvt.s32.f32 %v187
    %v220 = vcvt.s32.f32 %v188
    %v221 = vcvt.s32.f32 %v189
    %v222 = vcvt.s32.f32 %v190
    %v223 = vcvt.s32.f32 %v191
    %v224 = vcvt.s32.f32 %v192
    %v225 = vcvt.s32.f32 %v193
    %v226 = vcvt.s32.f32 %v194
    %v227 = vcvt.s32.f32 %v195
    %v228 = vcvt.s32.f32 %v196
    %v229 = vcvt.s32.f32 %v197
    %v230 = vcvt.s32.f32 %v198
    %v231 = vcvt.s32.f32 %v199
    %v232 = vcvt.s32.f32 %v200
    %v233 = vcvt.s32.f32 %v201
    %v234 = vcvt.s32.f32 %v202
    %v235 = vcvt.s32.f32 %v203
    %v236 = vcvt.s32.f32 %v204
    %v237 = vcvt.s32.f32 %v205
    %v238 = vcvt.s32.f32 %v206
    %v239 = vcvt.s32.f32 %v207
    %v240 = vcvt.s32.f32 %v208
    %v241 = vcvt.s32.f32 %v209
    %v242 = vcvt.s32.f32 %v210
    %v243 = vcvt.s32.f32 %v211
    %v244 = vcvt.s32.f32 %v212
    %v245 = vcvt.s32.f32 %v213
    %v246 = vcvt.s32.f32 %v214
    %v247 = vcvt.s32.f32 %v215
    %v248 = vcvt.s32.f32 %v216
    %v249 = vcvt.s32.f32 %v217
    %v250 = vcvt.s32.f32 %v218
    %v251 = vld [vmem:[#allocation5] sm:$0xff]
    %vm252 = vcmp.ne.f32.partialorder %v251, %v251
    %vm253 = vmxor %vm252, 1
    %v254 = vsel %vm253, %v251, 0.0
    %v255 = vsel %vm253, 1, 0
    %v256 = vcvt.s32.f32 %v255
    %v257 = vadd.s32 %v55, 256
    %v258 = vadd.s32 %v56, 256
    %v259 = vadd.s32 %v57, 256
    %v260 = vadd.s32 %v58, 256
    %v261 = vadd.s32 %v59, 256
    %v262 = vadd.s32 %v60, 256
    %v263 = vadd.s32 %v61, 256
    %v264 = vadd.s32 %v62, 256
    %v265 = vadd.s32 %v63, 256
    %v266 = vadd.s32 %v64, 256
    %v267 = vadd.s32 %v65, 256
    %v268 = vadd.s32 %v66, 256
    %v269 = vadd.s32 %v67, 256
    %v270 = vadd.s32 %v68, 256
    %v271 = vadd.s32 %v69, 256
    %v272 = vadd.s32 %v70, 256
    %vm273 = vcmp.ge.s32.totalorder %v257, %v89
    %vm274 = vcmp.ge.s32.totalorder %v258, %v89
    %vm275 = vcmp.ge.s32.totalorder %v259, %v89
    %vm276 = vcmp.ge.s32.totalorder %v260, %v89
    %vm277 = vcmp.ge.s32.totalorder %v261, %v89
    %vm278 = vcmp.ge.s32.totalorder %v262, %v89
    %vm279 = vcmp.ge.s32.totalorder %v263, %v89
    %vm280 = vcmp.ge.s32.totalorder %v264, %v89
    %vm281 = vcmp.ge.s32.totalorder %v265, %v89
    %vm282 = vcmp.ge.s32.totalorder %v266, %v89
    %vm283 = vcmp.ge.s32.totalorder %v267, %v89
    %vm284 = vcmp.ge.s32.totalorder %v268, %v89
    %vm285 = vcmp.ge.s32.totalorder %v269, %v89
    %vm286 = vcmp.ge.s32.totalorder %v270, %v89
    %vm287 = vcmp.ge.s32.totalorder %v271, %v89
    %vm288 = vcmp.ge.s32.totalorder %v272, %v89
    %vm289 = vcmp.lt.s32.totalorder %v257, %v122
    %vm290 = vcmp.lt.s32.totalorder %v258, %v122
    %vm291 = vcmp.lt.s32.totalorder %v259, %v122
    %vm292 = vcmp.lt.s32.totalorder %v260, %v122
    %vm293 = vcmp.lt.s32.totalorder %v261, %v122
    %vm294 = vcmp.lt.s32.totalorder %v262, %v122
    %vm295 = vcmp.lt.s32.totalorder %v263, %v122
    %vm296 = vcmp.lt.s32.totalorder %v264, %v122
    %vm297 = vcmp.lt.s32.totalorder %v265, %v122
    %vm298 = vcmp.lt.s32.totalorder %v266, %v122
    %vm299 = vcmp.lt.s32.totalorder %v267, %v122
    %vm300 = vcmp.lt.s32.totalorder %v268, %v122
    %vm301 = vcmp.lt.s32.totalorder %v269, %v122
    %vm302 = vcmp.lt.s32.totalorder %v270, %v122
    %vm303 = vcmp.lt.s32.totalorder %v271, %v122
    %vm304 = vcmp.lt.s32.totalorder %v272, %v122
    %vm305 = vmand %vm273, %vm289
    %vm306 = vmand %vm274, %vm290
    %vm307 = vmand %vm275, %vm291
    %vm308 = vmand %vm276, %vm292
    %vm309 = vmand %vm277, %vm293
    %vm310 = vmand %vm278, %vm294
    %vm311 = vmand %vm279, %vm295
    %vm312 = vmand %vm280, %vm296
    %vm313 = vmand %vm281, %vm297
    %vm314 = vmand %vm282, %vm298
    %vm315 = vmand %vm283, %vm299
    %vm316 = vmand %vm284, %vm300
    %vm317 = vmand %vm285, %vm301
    %vm318 = vmand %vm286, %vm302
    %vm319 = vmand %vm287, %vm303
    %vm320 = vmand %vm288, %vm304
    %v321 = vsel %vm305, 1, 0
    %v322 = vsel %vm306, 1, 0
    %v323 = vsel %vm307, 1, 0
    %v324 = vsel %vm308, 1, 0
    %v325 = vsel %vm309, 1, 0
    %v326 = vsel %vm310, 1, 0
    %v327 = vsel %vm311, 1, 0
    %v328 = vsel %vm312, 1, 0
    %v329 = vsel %vm313, 1, 0
    %v330 = vsel %vm314, 1, 0
    %v331 = vsel %vm315, 1, 0
    %v332 = vsel %vm316, 1, 0
    %v333 = vsel %vm317, 1, 0
    %v334 = vsel %vm318, 1, 0
    %v335 = vsel %vm319, 1, 0
    %v336 = vsel %vm320, 1, 0
    %v337 = vcvt.s32.f32 %v321
    %v338 = vcvt.s32.f32 %v322
    %v339 = vcvt.s32.f32 %v323
    %v340 = vcvt.s32.f32 %v324
    %v341 = vcvt.s32.f32 %v325
    %v342 = vcvt.s32.f32 %v326
    %v343 = vcvt.s32.f32 %v327
    %v344 = vcvt.s32.f32 %v328
    %v345 = vcvt.s32.f32 %v329
    %v346 = vcvt.s32.f32 %v330
    %v347 = vcvt.s32.f32 %v331
    %v348 = vcvt.s32.f32 %v332
    %v349 = vcvt.s32.f32 %v333
    %v350 = vcvt.s32.f32 %v334
    %v351 = vcvt.s32.f32 %v335
    %v352 = vcvt.s32.f32 %v336
    %353 = vmatprep.subr.mxu0 0.0
    %354 = vmatpush1.msra.mxu0 %v352
    %355 = vmatprep.subr.mxu0 0.0
    %356 = vmatpush1.msra.mxu0 %v351
    %357 = vmatprep.subr.mxu0 0.0
    %358 = vmatpush1.msra.mxu0 %v350
    %359 = vmatprep.subr.mxu0 0.0
    %360 = vmatpush1.msra.mxu0 %v349
    %361 = vmatprep.subr.mxu0 0.0
    %362 = vmatpush1.msra.mxu0 %v348
    %363 = vmatprep.subr.mxu0 0.0
    %364 = vmatpush1.msra.mxu0 %v347
    %365 = vmatprep.subr.mxu0 0.0
    %366 = vmatpush1.msra.mxu0 %v346
    %367 = vmatprep.subr.mxu0 0.0
    %368 = vmatpush1.msra.mxu0 %v345
    %369 = vmatprep.subr.mxu0 0.0
    %370 = vmatpush1.msra.mxu0 %v344
    %371 = vmatprep.subr.mxu0 0.0
    %372 = vmatpush1.msra.mxu0 %v343
    %373 = vmatprep.subr.mxu0 0.0
    %374 = vmatpush1.msra.mxu0 %v342
    %375 = vmatprep.subr.mxu0 0.0
    %376 = vmatpush1.msra.mxu0 %v341
    %377 = vmatprep.subr.mxu0 0.0
    %378 = vmatpush1.msra.mxu0 %v340
    %379 = vmatprep.subr.mxu0 0.0
    %380 = vmatpush1.msra.mxu0 %v339
    %381 = vmatprep.subr.mxu0 0.0
    %382 = vmatpush1.msra.mxu0 %v338
    %383 = vmatprep.subr.mxu0 0.0
    %384 = vmatpush1.msra.mxu0 %v337
    %385 = vmatprep.subr.mxu0 0.0
    %386 = vmatpush2.msra.mxu0 0.0
    %387 = vmatprep.subr.mxu0 0.0
    %388 = vmatpush2.msra.mxu0 0.0
    %389 = vmatprep.subr.mxu0 0.0
    %390 = vmatpush2.msra.mxu0 0.0
    %391 = vmatprep.subr.mxu0 0.0
    %392 = vmatpush2.msra.mxu0 0.0
    %393 = vmatprep.subr.mxu0 0.0
    %394 = vmatpush2.msra.mxu0 0.0
    %395 = vmatprep.subr.mxu0 0.0
    %396 = vmatpush2.msra.mxu0 0.0
    %397 = vmatprep.subr.mxu0 0.0
    %398 = vmatpush2.msra.mxu0 0.0
    %399 = vmatprep.subr.mxu0 0.0
    %400 = vmatpush2.msra.mxu0 0.0
    %401 = vmatprep.subr.mxu0 0.0
    %402 = vmatpush2.msra.mxu0 0.0
    %403 = vmatprep.subr.mxu0 0.0
    %404 = vmatpush2.msra.mxu0 0.0
    %405 = vmatprep.subr.mxu0 0.0
    %406 = vmatpush2.msra.mxu0 0.0
    %407 = vmatprep.subr.mxu0 0.0
    %408 = vmatpush2.msra.mxu0 0.0
    %409 = vmatprep.subr.mxu0 0.0
    %410 = vmatpush2.msra.mxu0 0.0
    %411 = vmatprep.subr.mxu0 0.0
    %412 = vmatpush2.msra.mxu0 0.0
    %413 = vmatprep.subr.mxu0 0.0
    %414 = vmatpush2.msra.mxu0 0.0
    %415 = vmatprep.subr.mxu0 0.0
    %416 = vmatpush2.msra.mxu0 0.0
    %417 = vmatprep.mubr.f32.mxu0 0.0
    %418 = vmatmul.mubr.f32.gmra.mxu0 %v254
    %v419 = vpop.f32.mrf.mxu0
    %v420 = vadd.f32 0.0, %v419
    %v421 = vpop.f32.mrf.mxu0
    %422 = vmatprep.mubr.f32.mxu0 0.0
    %423 = vmatmul.mubr.f32.gmra.mxu0 %v256
    %v424 = vpop.f32.mrf.mxu0
    %v425 = vadd.f32 0.0, %v424
    %v426 = vpop.f32.mrf.mxu0
    %427 = vdwg.mxu0
    %428 = vmatprep.subr.mxu0 0.0
    %429 = vmatpush1.msra.mxu0 %v234
    %430 = vmatprep.subr.mxu0 0.0
    %431 = vmatpush1.msra.mxu0 %v233
    %432 = vmatprep.subr.mxu0 0.0
    %433 = vmatpush1.msra.mxu0 %v232
    %434 = vmatprep.subr.mxu0 0.0
    %435 = vmatpush1.msra.mxu0 %v231
    %436 = vmatprep.subr.mxu0 0.0
    %437 = vmatpush1.msra.mxu0 %v230
    %438 = vmatprep.subr.mxu0 0.0
    %439 = vmatpush1.msra.mxu0 %v229
    %440 = vmatprep.subr.mxu0 0.0
    %441 = vmatpush1.msra.mxu0 %v228
    %442 = vmatprep.subr.mxu0 0.0
    %443 = vmatpush1.msra.mxu0 %v227
    %444 = vmatprep.subr.mxu0 0.0
    %445 = vmatpush1.msra.mxu0 %v226
    %446 = vmatprep.subr.mxu0 0.0
    %447 = vmatpush1.msra.mxu0 %v225
    %448 = vmatprep.subr.mxu0 0.0
    %449 = vmatpush1.msra.mxu0 %v224
    %450 = vmatprep.subr.mxu0 0.0
    %451 = vmatpush1.msra.mxu0 %v223
    %452 = vmatprep.subr.mxu0 0.0
    %453 = vmatpush1.msra.mxu0 %v222
    %454 = vmatprep.subr.mxu0 0.0
    %455 = vmatpush1.msra.mxu0 %v221
    %456 = vmatprep.subr.mxu0 0.0
    %457 = vmatpush1.msra.mxu0 %v220
    %458 = vmatprep.subr.mxu0 0.0
    %459 = vmatpush1.msra.mxu0 %v219
    %460 = vmatprep.subr.mxu0 0.0
    %461 = vmatpush2.msra.mxu0 %v250
    %462 = vmatprep.subr.mxu0 0.0
    %463 = vmatpush2.msra.mxu0 %v249
    %464 = vmatprep.subr.mxu0 0.0
    %465 = vmatpush2.msra.mxu0 %v248
    %466 = vmatprep.subr.mxu0 0.0
    %467 = vmatpush2.msra.mxu0 %v247
    %468 = vmatprep.subr.mxu0 0.0
    %469 = vmatpush2.msra.mxu0 %v246
    %470 = vmatprep.subr.mxu0 0.0
    %471 = vmatpush2.msra.mxu0 %v245
    %472 = vmatprep.subr.mxu0 0.0
    %473 = vmatpush2.msra.mxu0 %v244
    %474 = vmatprep.subr.mxu0 0.0
    %475 = vmatpush2.msra.mxu0 %v243
    %476 = vmatprep.subr.mxu0 0.0
    %477 = vmatpush2.msra.mxu0 %v242
    %478 = vmatprep.subr.mxu0 0.0
    %479 = vmatpush2.msra.mxu0 %v241
    %480 = vmatprep.subr.mxu0 0.0
    %481 = vmatpush2.msra.mxu0 %v240
    %482 = vmatprep.subr.mxu0 0.0
    %483 = vmatpush2.msra.mxu0 %v239
    %484 = vmatprep.subr.mxu0 0.0
    %485 = vmatpush2.msra.mxu0 %v238
    %486 = vmatprep.subr.mxu0 0.0
    %487 = vmatpush2.msra.mxu0 %v237
    %488 = vmatprep.subr.mxu0 0.0
    %489 = vmatpush2.msra.mxu0 %v236
    %490 = vmatprep.subr.mxu0 0.0
    %491 = vmatpush2.msra.mxu0 %v235
    %492 = vmatprep.mubr.f32.mxu0 %v49
    %493 = vmatmul.mubr.f32.gmra.mxu0 %v48
    %v494 = vpop.f32.mrf.mxu0
    %v495 = vadd.f32 %v420, %v494
    %v496 = vpop.f32.mrf.mxu0
    %497 = vmatprep.mubr.f32.mxu0 %v53
    %498 = vmatmul.mubr.f32.gmra.mxu0 %v52
    %v499 = vpop.f32.mrf.mxu0
    %v500 = vadd.f32 %v425, %v499
    %v501 = vpop.f32.mrf.mxu0
    %502 = vdwg.mxu0
    %v503 = vmax.f32 %v500, 1.0
    %v504 = vrcp.pop %v503
    %v505 = vmul.f32 %v495, %v504
    %vm506 = vcmp.eq.f32.partialorder %v505, 0.0
    %v507 = vsel %vm506, nan, %v505
    %508 = vst [vmem:[#allocation7] sm:$0xff] %v507
    // Predicated region
    $region18: #{tpu_custom_call.1} parent=1 // pred_check
      _
    $region19: #{tpu_custom_call.1} parent=1 // pred_check_branch
      %510 = sbr.rel (0) target = $region21
    $region20: #{tpu_custom_call.1} parent=1 // pred_region
      %s512 = ssub.s32 128, 128
      %513 = vsyncadd [#allocation4], %s512
      %s515 = sshll.u32 [#allocation7], 4
      %s516 = int_to_ptr.vmem [resolvable:$true] %s515
      %518 = dma.vmem_to_hbm [thread:$0]  %s516, 128, %s2, [#allocation4]
    $region21: #{tpu_custom_call.1} parent=1 // pred_fallthru
      _
    // Predicated region
    $region22: #{tpu_custom_call.1} parent=1 // pred_check
      _
    $region23: #{tpu_custom_call.1} parent=1 // pred_check_branch
      %520 = sbr.rel (0) target = $region25
    $region24: #{tpu_custom_call.1} parent=1 // pred_region
      %521 = dma.done [#allocation4], 128
    $region25: #{tpu_custom_call.1} parent=1 // pred_fallthru
      _
    %522 = vsyncpa [#allocation3], 1
    %523 = vsyncpa [#allocation6], 1
    %524 = vsyncpa [#allocation4], 1

</llo_original>
